<compile_context>
chip_gen: v7x
topology: tpu7x:2x2x1
jax: 0.10.0
libtpu: 0.0.40
codegen_flags: <defaults>
</compile_context>

<pallas_src>
import jax
import jax.numpy as jnp
from jax.experimental import pallas as pl
from jax.experimental.pallas import tpu as pltpu

OUT_PLANES = 64       # small stand-in for resnet101 fc.in_features (2048)
NUM_FEATURES = 128    # module default num_features
BN_EPS = 1e-5         # nn.BatchNorm1d default eps
L2_EPS = 1e-12        # F.normalize default eps


# ----------------------------- kernel ---------------------------------------


def head_kernel(x_ref, w_ref, b_ref, o_ref):
    # x_ref: (TN, S, C) backbone features (any float dtype)
    # w_ref: (C, F) BN/avg-pool-folded linear weight (f32)
    # b_ref: (1, F) BN-folded bias (f32)
    # o_ref: (TN, F) L2-normalized embeddings (f32)

    # Global SUM pool over spatial positions (avg-pool's 1/S is folded into w).
    pooled = jnp.sum(x_ref[...].astype(jnp.float32), axis=1)          # (TN, C)

    # Fused Linear + eval-mode BatchNorm1d (folded in the wrapper).
    y = jnp.dot(pooled, w_ref[...], preferred_element_type=jnp.float32)
    y = y + b_ref[...]                                                 # (TN, F)

    # F.normalize: y / max(||y||, eps)  ==  y * rsqrt(max(||y||^2, eps^2))
    sumsq = jnp.sum(y * y, axis=-1, keepdims=True)                     # (TN, 1)
    o_ref[...] = y * jax.lax.rsqrt(jnp.maximum(sumsq, L2_EPS * L2_EPS))


# ----------------------------- wrapper ---------------------------------------


def _choose_batch_tile(n, s, c, itemsize, target_tile_bytes=8 << 20):
    """Batch tile: multiple of 8 sublanes, sized so double-buffered tiles fit VMEM
    comfortably on every generation (v7x has only 64 MiB physical)."""
    per_sample = max(s * c * itemsize, 1)
    tn = (target_tile_bytes // per_sample) // 8 * 8
    n_pad8 = ((n + 7) // 8) * 8
    tn = max(8, min(tn, n_pad8))
    return int(tn)


def fold_params(params, spatial_size):
    """Fold BatchNorm (eval) and the average-pool 1/S into the linear layer."""
    w_feat, b_feat, gamma, beta, rmean, rvar = params
    inv_std = jax.lax.rsqrt(rvar + BN_EPS)            # (1, F)
    scale = gamma * inv_std                           # (1, F)
    w_fold = (w_feat * scale) / float(spatial_size)   # (C, F) — sum-pool variant
    b_fold = (b_feat - rmean) * scale + beta          # (1, F)
    return w_fold.astype(jnp.float32), b_fold.astype(jnp.float32)


def resnet_openreid_forward(feats_nhwc, params):
    """feats_nhwc: (N, H, W, C) backbone layer4 output, channel-last (no transpose pass)."""
    n, h, w, c = feats_nhwc.shape
    s = h * w
    x = feats_nhwc.reshape(n, s, c)                   # contiguous reshape, free

    w_fold, b_fold = fold_params(params, s)

    tn = _choose_batch_tile(n, s, c, x.dtype.itemsize)
    n_pad = ((n + tn - 1) // tn) * tn
    if n_pad != n:
        x = jnp.pad(x, ((0, n_pad - n), (0, 0), (0, 0)))

    grid = (n_pad // tn,)

    out = pl.pallas_call(
        head_kernel,
        grid=grid,
        out_shape=jax.ShapeDtypeStruct((n_pad, NUM_FEATURES), jnp.float32),
        in_specs=[
            pl.BlockSpec((tn, s, c), lambda i: (i, 0, 0)),              # feature-map tile
            pl.BlockSpec((c, NUM_FEATURES), lambda i: (0, 0)),          # folded weight (resident)
            pl.BlockSpec((1, NUM_FEATURES), lambda i: (0, 0)),          # folded bias (resident)
        ],
        out_specs=pl.BlockSpec((tn, NUM_FEATURES), lambda i: (i, 0)),
        compiler_params=pltpu.CompilerParams(
            dimension_semantics=("parallel",),
            vmem_limit_bytes=64 * 1024 * 1024,
        ),
    )(x, w_fold, b_fold)

    return out[:n]


# ----------------------------- params / reference ----------------------------


def init_params(key):
    # feat: Linear(out_planes, num_features), kaiming_normal(mode='fan_out') -> std = sqrt(2/fan_out)
    (kw,) = jax.random.split(key, 1)
    std = (2.0 / NUM_FEATURES) ** 0.5
    w_feat = std * jax.random.normal(kw, (OUT_PLANES, NUM_FEATURES), dtype=jnp.float32)
    b_feat = jnp.zeros((1, NUM_FEATURES), jnp.float32)   # init.constant(bias, 0)
    gamma = jnp.ones((1, NUM_FEATURES), jnp.float32)     # init.constant(bn.weight, 1)
    beta = jnp.zeros((1, NUM_FEATURES), jnp.float32)     # init.constant(bn.bias, 0)
    rmean = jnp.zeros((1, NUM_FEATURES), jnp.float32)    # fresh BN running stats
    rvar = jnp.ones((1, NUM_FEATURES), jnp.float32)
    return (w_feat, b_feat, gamma, beta, rmean, rvar)


def reference_forward(feats_nhwc, params):
    """Pure-JAX reference matching the PyTorch head semantics (un-fused)."""
    w_feat, b_feat, gamma, beta, rmean, rvar = params
    pooled = jnp.mean(feats_nhwc.astype(jnp.float32), axis=(1, 2))     # (N, C)
    feat = pooled @ w_feat + b_feat
    y = (feat - rmean) * jax.lax.rsqrt(rvar + BN_EPS) * gamma + beta
    nrm = jnp.sqrt(jnp.sum(y * y, axis=-1, keepdims=True))
    return y / jnp.maximum(nrm, L2_EPS)


# ----------------------------- demo -----------------------------------------


if __name__ == "__main__":
    key = jax.random.PRNGKey(0)
    k_x, k_p = jax.random.split(key)

    # small synthetic backbone output: batch=2, spatial=4x4, channels=OUT_PLANES (channel-last)
    N, H, W = 2, 4, 4
    feats = jax.random.normal(k_x, (N, H, W, OUT_PLANES), dtype=jnp.float32)
    params = init_params(k_p)

    out = resnet_openreid_forward(feats, params)
    out = jax.block_until_ready(out)

    ref = reference_forward(feats, params)
    assert out.shape == (N, NUM_FEATURES)
    assert jnp.allclose(out, ref, atol=1e-5, rtol=1e-5), "mismatch vs pure-JAX reference"

    print("KERNEL_OK")
</pallas_src>

<mosaic_0001>
module attributes {stable_mosaic.version = 11 : i64} {
  func.func @head_kernel(%arg0: i32, %arg1: memref<8x16x64xf32, #tpu.memory_space<vmem>>, %arg2: memref<64x128xf32, #tpu.memory_space<vmem>>, %arg3: memref<1x128xf32, #tpu.memory_space<vmem>>, %arg4: memref<8x128xf32, #tpu.memory_space<vmem>>) attributes {dimension_semantics = [#tpu.dimension_semantics<parallel>], iteration_bounds = array<i64: 1>, scalar_prefetch = 0 : i64, scratch_operands = 0 : i64, tpu.core_type = #tpu.core_type<tc>, window_params = [{transform_indices = @transform_0, window_bounds = array<i64: 8, 16, 64>}, {pipeline_mode = #tpu.pipeline_mode<synchronous>, transform_indices = @transform_1, window_bounds = array<i64: 64, 128>}, {pipeline_mode = #tpu.pipeline_mode<synchronous>, transform_indices = @transform_2, window_bounds = array<i64: 1, 128>}, {transform_indices = @transform_3, window_bounds = array<i64: 8, 128>}]} {
    %c0 = arith.constant 0 : index
    %c0_0 = arith.constant 0 : index
    %c0_1 = arith.constant 0 : index
    %0 = vector.load %arg1[%c0, %c0_0, %c0_1] : memref<8x16x64xf32, #tpu.memory_space<vmem>>, vector<8x16x64xf32>
    %cst = arith.constant dense<0.000000e+00> : vector<8x64xf32>
    %1 = vector.multi_reduction <add>, %0, %cst [1] : vector<8x16x64xf32> to vector<8x64xf32>
    %c0_2 = arith.constant 0 : index
    %c0_3 = arith.constant 0 : index
    %2 = vector.load %arg2[%c0_2, %c0_3] : memref<64x128xf32, #tpu.memory_space<vmem>>, vector<64x128xf32>
    %cst_4 = arith.constant dense<0.000000e+00> : vector<8x128xf32>
    %3 = tpu.matmul %1, %2, %cst_4 {dimension_numbers = #tpu.dot_dimension_numbers<[1], [0], [0], [1], [0, 0, 1, 1], [], []>} : vector<8x64xf32>, vector<64x128xf32>, vector<8x128xf32> -> vector<8x128xf32>
    %c0_5 = arith.constant 0 : index
    %c0_6 = arith.constant 0 : index
    %4 = vector.load %arg3[%c0_5, %c0_6] : memref<1x128xf32, #tpu.memory_space<vmem>>, vector<1x128xf32>
    %5 = vector.broadcast %4 : vector<1x128xf32> to vector<8x128xf32>
    %6 = arith.addf %3, %5 : vector<8x128xf32>
    %7 = arith.mulf %6, %6 : vector<8x128xf32>
    %cst_7 = arith.constant dense<0.000000e+00> : vector<8xf32>
    %8 = vector.multi_reduction <add>, %7, %cst_7 [1] : vector<8x128xf32> to vector<8xf32>
    %9 = vector.shape_cast %8 : vector<8xf32> to vector<8x1xf32>
    %cst_8 = arith.constant 1.000000e-24 : f32
    %10 = vector.broadcast %cst_8 : f32 to vector<8x1xf32>
    %11 = arith.maximumf %9, %10 : vector<8x1xf32>
    %12 = math.rsqrt %11 : vector<8x1xf32>
    %13 = vector.broadcast %12 : vector<8x1xf32> to vector<8x128xf32>
    %14 = arith.mulf %6, %13 : vector<8x128xf32>
    %c0_9 = arith.constant 0 : index
    %c0_10 = arith.constant 0 : index
    %15 = vector.load %arg4[%c0_9, %c0_10] : memref<8x128xf32, #tpu.memory_space<vmem>>, vector<8x128xf32>
    tpu.vector_store %arg4[%c0_9, %c0_10], %14 {strides = array<i32>} : memref<8x128xf32, #tpu.memory_space<vmem>>, vector<8x128xf32>,
    return
  }
  func.func @transform_0(%arg0: i32) -> (i32, i32, i32) {
    %c0_i32 = arith.constant 0 : i32
    %c0_i32_0 = arith.constant 0 : i32
    %c0_i32_1 = arith.constant 0 : i32
    return %arg0, %c0_i32, %c0_i32_0 : i32, i32, i32
  }
  func.func @transform_1(%arg0: i32) -> (i32, i32) {
    %c0_i32 = arith.constant 0 : i32
    %c0_i32_0 = arith.constant 0 : i32
    %c0_i32_1 = arith.constant 0 : i32
    return %c0_i32, %c0_i32_0 : i32, i32
  }
  func.func @transform_2(%arg0: i32) -> (i32, i32) {
    %c0_i32 = arith.constant 0 : i32
    %c0_i32_0 = arith.constant 0 : i32
    %c0_i32_1 = arith.constant 0 : i32
    return %c0_i32, %c0_i32_0 : i32, i32
  }
  func.func @transform_3(%arg0: i32) -> (i32, i32) {
    %c0_i32 = arith.constant 0 : i32
    %c0_i32_0 = arith.constant 0 : i32
    return %arg0, %c0_i32 : i32, i32
  }
}

</mosaic_0001>

<llo_original>
// kernel: tpu_custom_call.1
$region0: #{tpu_custom_call.1}
  #allocation0 [shape = 'u32[]', space=smem, size = 0x4, offset = 0x4, fixed_abs, tag = 'smem constant byte address 0x4 - core index']
  #allocation1 [shape = 'u32[144,128]{1,0:T(1,128)}', space=vmem, size = 0x12000, scoped, tag = 'internal scratch']
  %s0 = inlined_call_operand.hbm [shape: f32[8,16,64], index: 0, kind: input, shape index: {}]
  %s1 = inlined_call_operand.hbm [shape: f32[64,128], index: 1, kind: input, shape index: {}]
  %s2 = inlined_call_operand.hbm [shape: f32[1,128], index: 2, kind: input, shape index: {}]
  %s3 = inlined_call_operand.hbm [shape: f32[8,128], index: 3, kind: output, shape index: {}]
  %s4 = sld [smem:[#allocation0]]
  $region34: #{tpu_custom_call.1} parent=0
    _
  %s6 = ssub.s32 1, %s4
  %s7 = scalar_select 0, %s6, %s4
  $region1: #{tpu_custom_call.1} parent=0
    #allocation2 [shape = 'u8[65536]{0}', space=vmem, size = 0x10000, scoped, tag = 'input window, operand 0, single buffered']
    #allocation3 [shape = 's32[1]{0}', space=sflag, size = 0x4, scoped, tag = 'scoped memory for tpu_custom_call.1']
    #allocation4 [shape = 's32[1]{0}', space=sflag, size = 0x4, scoped, tag = 'scoped memory for tpu_custom_call.1']
    #allocation5 [shape = 'u8[32768]{0}', space=vmem, size = 0x8000, scoped, tag = 'input window, operand 1, single buffered']
    #allocation6 [shape = 's32[1]{0}', space=sflag, size = 0x4, scoped, tag = 'scoped memory for tpu_custom_call.1']
    #allocation7 [shape = 'u8[512]{0}', space=vmem, size = 0x400, scoped, tag = 'input window, operand 2, single buffered']
    #allocation8 [shape = 'u8[4096]{0}', space=vmem, size = 0x1000, scoped, tag = 'output window, operand 0, single buffered']
    %8 = vsyncpa [#allocation3], 0
    %9 = vsyncpa [#allocation6], 0
    %10 = vsyncpa [#allocation4], 0
    // Predicated region
    $region2: #{tpu_custom_call.1} parent=1 // pred_check
      _
    $region3: #{tpu_custom_call.1} parent=1 // pred_check_branch
      %12 = sbr.rel (0) target = $region5
    $region4: #{tpu_custom_call.1} parent=1 // pred_region
      %s14 = ssub.s32 2048, 2048
      %15 = vsyncadd [#allocation3], %s14
      %s16 = sshll.u32 [#allocation2], 4
      %s17 = int_to_ptr.vmem [resolvable:$true] %s16
      %22 = dma.hbm_to_vmem [thread:$0]  %s0, 2048, %s17, [#allocation3], 128, 128, 8
    $region5: #{tpu_custom_call.1} parent=1 // pred_fallthru
      _
    // Predicated region
    $region6: #{tpu_custom_call.1} parent=1 // pred_check
      _
    $region7: #{tpu_custom_call.1} parent=1 // pred_check_branch
      %24 = sbr.rel (0) target = $region9
    $region8: #{tpu_custom_call.1} parent=1 // pred_region
      %s26 = ssub.s32 1024, 1024
      %27 = vsyncadd [#allocation6], %s26
      %s28 = sshll.u32 [#allocation5], 4
      %s29 = int_to_ptr.vmem [resolvable:$true] %s28
      %34 = dma.hbm_to_vmem [thread:$0]  %s1, 1024, %s29, [#allocation6], 128, 128, 8
    $region9: #{tpu_custom_call.1} parent=1 // pred_fallthru
      _
    // Predicated region
    $region10: #{tpu_custom_call.1} parent=1 // pred_check
      _
    $region11: #{tpu_custom_call.1} parent=1 // pred_check_branch
      %36 = sbr.rel (0) target = $region13
    $region12: #{tpu_custom_call.1} parent=1 // pred_region
      %s38 = ssub.s32 16, 16
      %39 = vsyncadd [#allocation6], %s38
      %s41 = sshll.u32 [#allocation7], 4
      %s42 = int_to_ptr.vmem [resolvable:$true] %s41
      %44 = dma.hbm_to_vmem [thread:$0]  %s2, 16, %s42, [#allocation6]
    $region13: #{tpu_custom_call.1} parent=1 // pred_fallthru
      _
    // Predicated region
    $region14: #{tpu_custom_call.1} parent=1 // pred_check
      _
    $region15: #{tpu_custom_call.1} parent=1 // pred_check_branch
      %46 = sbr.rel (0) target = $region17
    $region16: #{tpu_custom_call.1} parent=1 // pred_region
      %47 = dma.done [#allocation3], 2048
    $region17: #{tpu_custom_call.1} parent=1 // pred_fallthru
      _
    // Predicated region
    $region18: #{tpu_custom_call.1} parent=1 // pred_check
      _
    $region19: #{tpu_custom_call.1} parent=1 // pred_check_branch
      %49 = sbr.rel (0) target = $region21
    $region20: #{tpu_custom_call.1} parent=1 // pred_region
      %50 = dma.done [#allocation6], 1024
    $region21: #{tpu_custom_call.1} parent=1 // pred_fallthru
      _
    // Predicated region
    $region22: #{tpu_custom_call.1} parent=1 // pred_check
      _
    $region23: #{tpu_custom_call.1} parent=1 // pred_check_branch
      %52 = sbr.rel (0) target = $region25
    $region24: #{tpu_custom_call.1} parent=1 // pred_region
      %53 = dma.done [#allocation6], 16
    $region25: #{tpu_custom_call.1} parent=1 // pred_fallthru
      _
    %v54 = vld [vmem:[#allocation2] sm:$0xff]
    %v55 = vld [vmem:[#allocation2 + $0x8] sm:$0xff]
    %v56 = vld [vmem:[#allocation2 + $0x10] sm:$0xff]
    %v57 = vld [vmem:[#allocation2 + $0x18] sm:$0xff]
    %v58 = vld [vmem:[#allocation2 + $0x20] sm:$0xff]
    %v59 = vld [vmem:[#allocation2 + $0x28] sm:$0xff]
    %v60 = vld [vmem:[#allocation2 + $0x30] sm:$0xff]
    %v61 = vld [vmem:[#allocation2 + $0x38] sm:$0xff]
    %v62 = vld [vmem:[#allocation2 + $0x40] sm:$0xff]
    %v63 = vld [vmem:[#allocation2 + $0x48] sm:$0xff]
    %v64 = vld [vmem:[#allocation2 + $0x50] sm:$0xff]
    %v65 = vld [vmem:[#allocation2 + $0x58] sm:$0xff]
    %v66 = vld [vmem:[#allocation2 + $0x60] sm:$0xff]
    %v67 = vld [vmem:[#allocation2 + $0x68] sm:$0xff]
    %v68 = vld [vmem:[#allocation2 + $0x70] sm:$0xff]
    %v69 = vld [vmem:[#allocation2 + $0x78] sm:$0xff]
    %vm70 = vcmask 523264
    %v71 = vsel %vm70, %v54, 0.0
    %v72 = vsel %vm70, %v55, 0.0
    %v73 = vadd.f32 %v71, %v72
    %v74 = vrot.slane %v73, 4
    %v75 = vadd.f32 %v73, %v74
    %v76 = vrot.slane %v75, 2
    %v77 = vadd.f32 %v75, %v76
    %v78 = vrot.slane %v77, 1
    %v79 = vadd.f32 %v77, %v78
    %v80 = vsel %vm70, %v56, 0.0
    %v81 = vsel %vm70, %v57, 0.0
    %v82 = vadd.f32 %v80, %v81
    %v83 = vrot.slane %v82, 4
    %v84 = vadd.f32 %v82, %v83
    %v85 = vrot.slane %v84, 2
    %v86 = vadd.f32 %v84, %v85
    %v87 = vrot.slane %v86, 1
    %v88 = vadd.f32 %v86, %v87
    %v89 = vsel %vm70, %v58, 0.0
    %v90 = vsel %vm70, %v59, 0.0
    %v91 = vadd.f32 %v89, %v90
    %v92 = vrot.slane %v91, 4
    %v93 = vadd.f32 %v91, %v92
    %v94 = vrot.slane %v93, 2
    %v95 = vadd.f32 %v93, %v94
    %v96 = vrot.slane %v95, 1
    %v97 = vadd.f32 %v95, %v96
    %v98 = vsel %vm70, %v60, 0.0
    %v99 = vsel %vm70, %v61, 0.0
    %v100 = vadd.f32 %v98, %v99
    %v101 = vrot.slane %v100, 4
    %v102 = vadd.f32 %v100, %v101
    %v103 = vrot.slane %v102, 2
    %v104 = vadd.f32 %v102, %v103
    %v105 = vrot.slane %v104, 1
    %v106 = vadd.f32 %v104, %v105
    %v107 = vsel %vm70, %v62, 0.0
    %v108 = vsel %vm70, %v63, 0.0
    %v109 = vadd.f32 %v107, %v108
    %v110 = vrot.slane %v109, 4
    %v111 = vadd.f32 %v109, %v110
    %v112 = vrot.slane %v111, 2
    %v113 = vadd.f32 %v111, %v112
    %v114 = vrot.slane %v113, 1
    %v115 = vadd.f32 %v113, %v114
    %v116 = vsel %vm70, %v64, 0.0
    %v117 = vsel %vm70, %v65, 0.0
    %v118 = vadd.f32 %v116, %v117
    %v119 = vrot.slane %v118, 4
    %v120 = vadd.f32 %v118, %v119
    %v121 = vrot.slane %v120, 2
    %v122 = vadd.f32 %v120, %v121
    %v123 = vrot.slane %v122, 1
    %v124 = vadd.f32 %v122, %v123
    %v125 = vsel %vm70, %v66, 0.0
    %v126 = vsel %vm70, %v67, 0.0
    %v127 = vadd.f32 %v125, %v126
    %v128 = vrot.slane %v127, 4
    %v129 = vadd.f32 %v127, %v128
    %v130 = vrot.slane %v129, 2
    %v131 = vadd.f32 %v129, %v130
    %v132 = vrot.slane %v131, 1
    %v133 = vadd.f32 %v131, %v132
    %v134 = vsel %vm70, %v68, 0.0
    %v135 = vsel %vm70, %v69, 0.0
    %v136 = vadd.f32 %v134, %v135
    %v137 = vrot.slane %v136, 4
    %v138 = vadd.f32 %v136, %v137
    %v139 = vrot.slane %v138, 2
    %v140 = vadd.f32 %v138, %v139
    %v141 = vrot.slane %v140, 1
    %v142 = vadd.f32 %v140, %v141
    %v143 = vld [vmem:[#allocation5] sm:$0xff]
    %v144 = vld [vmem:[#allocation5 + $0x8] sm:$0xff]
    %v145 = vld [vmem:[#allocation5 + $0x10] sm:$0xff]
    %v146 = vld [vmem:[#allocation5 + $0x18] sm:$0xff]
    %v147 = vld [vmem:[#allocation5 + $0x20] sm:$0xff]
    %v148 = vld [vmem:[#allocation5 + $0x28] sm:$0xff]
    %v149 = vld [vmem:[#allocation5 + $0x30] sm:$0xff]
    %v150 = vld [vmem:[#allocation5 + $0x38] sm:$0xff]
    %v151 = vld [vmem:[#allocation7] sm:$0x1]
    %v153 = vlaneseq
    %v154 = vshrl.u32 %v153, 7
    %v155 = vsub.s32 0, %v154
    %v156 = vrot.slane %v151, %v155
    %vm166 = vcmask 1041409
    %v167 = vsel %vm166, %v88, %v79
    %vm168 = vcmask 1042434
    %v169 = vsel %vm168, %v97, %v167
    %vm170 = vcmask 1043459
    %v171 = vsel %vm170, %v106, %v169
    %vm172 = vcmask 1044484
    %v173 = vsel %vm172, %v115, %v171
    %vm174 = vcmask 1045509
    %v175 = vsel %vm174, %v124, %v173
    %vm176 = vcmask 1046534
    %v177 = vsel %vm176, %v133, %v175
    %vm178 = vcmask 1047559
    %v179 = vsel %vm178, %v142, %v177
    %v180 = vsel %vm70, %v179, 0
    %182 = vmatprep.subr.mxu0 0.0
    %183 = vmatpush1.msra.mxu0 %v143
    %184 = vmatprep.subr.mxu0 0.0
    %185 = vmatpush1.msra.mxu0 %v144
    %186 = vmatprep.subr.mxu0 0.0
    %187 = vmatpush1.msra.mxu0 %v145
    %188 = vmatprep.subr.mxu0 0.0
    %189 = vmatpush1.msra.mxu0 %v146
    %190 = vmatprep.subr.mxu0 0.0
    %191 = vmatpush1.msra.mxu0 %v147
    %192 = vmatprep.subr.mxu0 0.0
    %193 = vmatpush1.msra.mxu0 %v148
    %194 = vmatprep.subr.mxu0 0.0
    %195 = vmatpush1.msra.mxu0 %v149
    %196 = vmatprep.subr.mxu0 0.0
    %197 = vmatpush1.msra.mxu0 %v150
    %198 = vmatprep.subr.mxu0 0.0
    %199 = vmatpush1.msra.mxu0 0.0
    %200 = vmatprep.subr.mxu0 0.0
    %201 = vmatpush1.msra.mxu0 0.0
    %202 = vmatprep.subr.mxu0 0.0
    %203 = vmatpush1.msra.mxu0 0.0
    %204 = vmatprep.subr.mxu0 0.0
    %205 = vmatpush1.msra.mxu0 0.0
    %206 = vmatprep.subr.mxu0 0.0
    %207 = vmatpush1.msra.mxu0 0.0
    %208 = vmatprep.subr.mxu0 0.0
    %209 = vmatpush1.msra.mxu0 0.0
    %210 = vmatprep.subr.mxu0 0.0
    %211 = vmatpush1.msra.mxu0 0.0
    %212 = vmatprep.subr.mxu0 0.0
    %213 = vmatpush1.msra.mxu0 0.0
    %214 = vmatprep.subr.mxu0 0.0
    %215 = vmatpush1.msra.mxu0 0.0
    %216 = vmatprep.subr.mxu0 0.0
    %217 = vmatpush1.msra.mxu0 0.0
    %218 = vmatprep.subr.mxu0 0.0
    %219 = vmatpush1.msra.mxu0 0.0
    %220 = vmatprep.subr.mxu0 0.0
    %221 = vmatpush1.msra.mxu0 0.0
    %222 = vmatprep.subr.mxu0 0.0
    %223 = vmatpush1.msra.mxu0 0.0
    %224 = vmatprep.subr.mxu0 0.0
    %225 = vmatpush1.msra.mxu0 0.0
    %226 = vmatprep.subr.mxu0 0.0
    %227 = vmatpush1.msra.mxu0 0.0
    %228 = vmatprep.subr.mxu0 0.0
    %229 = vmatpush1.msra.mxu0 0.0
    %230 = vmatprep.subr.mxu0 0.0
    %231 = vmatpush1.msra.mxu0 0.0
    %232 = vmatprep.subr.mxu0 0.0
    %233 = vmatpush1.msra.mxu0 0.0
    %234 = vmatprep.subr.mxu0 0.0
    %235 = vmatpush1.msra.mxu0 0.0
    %236 = vmatprep.subr.mxu0 0.0
    %237 = vmatpush1.msra.mxu0 0.0
    %238 = vmatprep.subr.mxu0 0.0
    %239 = vmatpush1.msra.mxu0 0.0
    %240 = vmatprep.subr.mxu0 0.0
    %241 = vmatpush1.msra.mxu0 0.0
    %242 = vmatprep.subr.mxu0 0.0
    %243 = vmatpush1.msra.mxu0 0.0
    %244 = vmatprep.subr.mxu0 0.0
    %245 = vmatpush1.msra.mxu0 0.0
    %246 = vmatprep.mubr.f32.mxu0 0.0
    %247 = vmatmul.mubr.f32.gmra.mrb[0].mxu0 %v180
    %v248 = vpop.f32.mrb[0].mxu0
    %v249 = vadd.f32 %v156, %v248
    %v250 = vpop.f32.mrb[0].mxu0
    %251 = vdwg.mxu0
    %v252 = vmul.f32 %v249, %v249
    %253 = vadd.xlane.f32.xlu0 %v252
    %v254 = vpop.xlane.xlu0 %253
    %v255 = vmax.f32 %v254, 1e-24
    %v256 = vrsqrt.pop %v255
    %v257 = vmul.f32 %v249, %v256
    %258 = vst [vmem:[#allocation8] sm:$0xff] %v257
    // Predicated region
    $region26: #{tpu_custom_call.1} parent=1 // pred_check
      _
    $region27: #{tpu_custom_call.1} parent=1 // pred_check_branch
      %260 = sbr.rel (0) target = $region29
    $region28: #{tpu_custom_call.1} parent=1 // pred_region
      %s262 = ssub.s32 128, 128
      %263 = vsyncadd [#allocation4], %s262
      %s265 = sshll.u32 [#allocation8], 4
      %s266 = int_to_ptr.vmem [resolvable:$true] %s265
      %268 = dma.vmem_to_hbm [thread:$0]  %s266, 128, %s3, [#allocation4]
    $region29: #{tpu_custom_call.1} parent=1 // pred_fallthru
      _
    // Predicated region
    $region30: #{tpu_custom_call.1} parent=1 // pred_check
      _
    $region31: #{tpu_custom_call.1} parent=1 // pred_check_branch
      %270 = sbr.rel (0) target = $region33
    $region32: #{tpu_custom_call.1} parent=1 // pred_region
      %271 = dma.done [#allocation4], 128
    $region33: #{tpu_custom_call.1} parent=1 // pred_fallthru
      _
    %272 = vsyncpa [#allocation3], 1
    %273 = vsyncpa [#allocation6], 1
    %274 = vsyncpa [#allocation4], 1

</llo_original>
